<compile_context>
chip_gen: v7x
topology: tpu7x:2x2x1
jax: 0.10.0
libtpu: 0.0.40
codegen_flags: <defaults>
</compile_context>

<pallas_src>
import jax
import jax.numpy as jnp
from jax.experimental import pallas as pl
from jax.experimental.pallas import tpu as pltpu


def _convT1x1_kernel(x_ref, w_ref, b_ref, o_ref):
    # x_ref: (N, Cin, HWt) VMEM, lane-dense along HWt
    # w_ref: (Cin * Cout,) SMEM  (flattened PyTorch (Cin, Cout) weight)
    # b_ref: (Cout,) SMEM
    # o_ref: (N, Cout, HWt) VMEM
    cin = x_ref.shape[1]
    cout = o_ref.shape[1]

    # Single full-tile load; channel mix happens in registers.
    xv = x_ref[...].astype(jnp.float32)           # (N, Cin, HWt)
    chans = [xv[:, ci, :] for ci in range(cin)]   # each (N, HWt)

    rows = []
    for co in range(cout):
        acc = chans[0] * w_ref[co] + b_ref[co]    # w[ci=0, co], bias
        for ci in range(1, cin):
            acc = acc + chans[ci] * w_ref[ci * cout + co]
        rows.append(acc)

    # Single full-tile (unmasked) store of the whole (N, Cout, HWt) block.
    o_ref[...] = jnp.stack(rows, axis=1).astype(o_ref.dtype)


def conv_transpose2d_1x1(x_nchw, weight, bias):
    """x_nchw: (N, Cin, H, W); weight: (Cin, Cout, 1, 1) (PyTorch
    ConvTranspose2d layout); bias: (Cout,). Returns (N, Cout, H, W)."""
    N, Cin, H, W = x_nchw.shape
    Cout = weight.shape[1]
    HW = H * W
    itemsize = jnp.dtype(x_nchw.dtype).itemsize

    # Free reshapes (contiguous) — channels on the sublane axis, HW on lanes.
    x3 = x_nchw.reshape(N, Cin, HW)
    w_flat = weight.reshape(Cin * Cout)   # index [ci * Cout + co]
    b_flat = bias.reshape(Cout)

    # Lane-axis tiling: take the full HW in one step when small (single grid
    # step -> no per-step overhead); otherwise tile in big multiples of 128
    # so the memory-bound op stays near the HBM roofline and v7x's two TCs
    # can split the (parallel) HW axis.
    MAX_LANE_TILE = 2048
    if HW <= MAX_LANE_TILE or HW % 128 != 0:
        hw_tile = HW          # full extent — always a legal block shape
    else:
        hw_tile = MAX_LANE_TILE
    num_tiles = pl.cdiv(HW, hw_tile)

    out3 = pl.pallas_call(
        _convT1x1_kernel,
        out_shape=jax.ShapeDtypeStruct((N, Cout, HW), x_nchw.dtype),
        grid=(num_tiles,),
        in_specs=[
            pl.BlockSpec((N, Cin, hw_tile), lambda t: (0, 0, t)),
            pl.BlockSpec(memory_space=pltpu.MemorySpace.SMEM),
            pl.BlockSpec(memory_space=pltpu.MemorySpace.SMEM),
        ],
        out_specs=pl.BlockSpec((N, Cout, hw_tile), lambda t: (0, 0, t)),
        compiler_params=pltpu.CompilerParams(
            dimension_semantics=("parallel",),
        ),
        cost_estimate=pl.CostEstimate(
            flops=2 * N * HW * Cin * Cout,
            transcendentals=0,
            bytes_accessed=(N * HW * (Cin + Cout) * itemsize
                            + (Cin * Cout + Cout) * jnp.dtype(weight.dtype).itemsize),
        ),
    )(x3, w_flat, b_flat)

    # Free reshape back to NCHW.
    return out3.reshape(N, Cout, H, W)


if __name__ == "__main__":
    key = jax.random.PRNGKey(0)
    k_x, k_w, k_b = jax.random.split(key, 3)

    # Module: nn.ConvTranspose2d(2, 2, 1) -> Cin=2, Cout=2, kernel 1x1.
    N, Cin, Cout, H, W = 2, 2, 2, 16, 16

    x = jax.random.normal(k_x, (N, Cin, H, W), dtype=jnp.float32)
    # Deterministic synthetic params (same shapes as PyTorch's module).
    weight = jax.random.normal(k_w, (Cin, Cout, 1, 1), dtype=jnp.float32) * 0.5
    bias = jax.random.normal(k_b, (Cout,), dtype=jnp.float32) * 0.1

    out = conv_transpose2d_1x1(x, weight, bias)
    out = jax.block_until_ready(out)

    # Reference check in plain JAX (same math as PyTorch ConvTranspose2d 1x1).
    ref = (jnp.einsum("nihw,io->nohw", x, weight.reshape(Cin, Cout))
           + bias[None, :, None, None])
    assert out.shape == (N, Cout, H, W)
    assert jnp.allclose(out, ref, atol=1e-5, rtol=1e-5)

    print("KERNEL_OK")
</pallas_src>

<mosaic_0001>
module attributes {stable_mosaic.version = 11 : i64} {
  func.func @_convT1x1_kernel(%arg0: i32, %arg1: memref<2x2x256xf32, #tpu.memory_space<vmem>>, %arg2: memref<4xf32, #tpu.memory_space<smem>>, %arg3: memref<2xf32, #tpu.memory_space<smem>>, %arg4: memref<2x2x256xf32, #tpu.memory_space<vmem>>) attributes {dimension_semantics = [#tpu.dimension_semantics<parallel>], iteration_bounds = array<i64: 1>, scalar_prefetch = 0 : i64, scratch_operands = 0 : i64, tpu.core_type = #tpu.core_type<tc>, window_params = [{transform_indices = @transform_0, window_bounds = array<i64: 2, 2, 256>}, {transform_indices = @transform_1, window_bounds = array<i64: 4>}, {transform_indices = @transform_2, window_bounds = array<i64: 2>}, {transform_indices = @transform_3, window_bounds = array<i64: 2, 2, 256>}]} {
    %c0 = arith.constant 0 : index
    %c0_0 = arith.constant 0 : index
    %c0_1 = arith.constant 0 : index
    %0 = vector.load %arg1[%c0, %c0_0, %c0_1] : memref<2x2x256xf32, #tpu.memory_space<vmem>>, vector<2x2x256xf32>
    %1 = vector.extract_strided_slice %0 {offsets = [0, 0, 0], sizes = [2, 1, 256], strides = [1, 1, 1]} : vector<2x2x256xf32> to vector<2x1x256xf32>
    %2 = vector.shape_cast %1 : vector<2x1x256xf32> to vector<2x256xf32>
    %3 = vector.extract_strided_slice %0 {offsets = [0, 1, 0], sizes = [2, 1, 256], strides = [1, 1, 1]} : vector<2x2x256xf32> to vector<2x1x256xf32>
    %4 = vector.shape_cast %3 : vector<2x1x256xf32> to vector<2x256xf32>
    %c0_2 = arith.constant 0 : index
    %5 = memref.load %arg2[%c0_2] : memref<4xf32, #tpu.memory_space<smem>>
    %6 = vector.broadcast %5 : f32 to vector<2x256xf32>
    %7 = arith.mulf %2, %6 : vector<2x256xf32>
    %c0_3 = arith.constant 0 : index
    %8 = memref.load %arg3[%c0_3] : memref<2xf32, #tpu.memory_space<smem>>
    %9 = vector.broadcast %8 : f32 to vector<2x256xf32>
    %10 = arith.addf %7, %9 : vector<2x256xf32>
    %c2 = arith.constant 2 : index
    %11 = memref.load %arg2[%c2] : memref<4xf32, #tpu.memory_space<smem>>
    %12 = vector.broadcast %11 : f32 to vector<2x256xf32>
    %13 = arith.mulf %4, %12 : vector<2x256xf32>
    %14 = arith.addf %10, %13 : vector<2x256xf32>
    %c1 = arith.constant 1 : index
    %15 = memref.load %arg2[%c1] : memref<4xf32, #tpu.memory_space<smem>>
    %16 = vector.broadcast %15 : f32 to vector<2x256xf32>
    %17 = arith.mulf %2, %16 : vector<2x256xf32>
    %c1_4 = arith.constant 1 : index
    %18 = memref.load %arg3[%c1_4] : memref<2xf32, #tpu.memory_space<smem>>
    %19 = vector.broadcast %18 : f32 to vector<2x256xf32>
    %20 = arith.addf %17, %19 : vector<2x256xf32>
    %c3 = arith.constant 3 : index
    %21 = memref.load %arg2[%c3] : memref<4xf32, #tpu.memory_space<smem>>
    %22 = vector.broadcast %21 : f32 to vector<2x256xf32>
    %23 = arith.mulf %4, %22 : vector<2x256xf32>
    %24 = arith.addf %20, %23 : vector<2x256xf32>
    %25 = vector.shape_cast %14 : vector<2x256xf32> to vector<2x1x256xf32>
    %26 = vector.shape_cast %24 : vector<2x256xf32> to vector<2x1x256xf32>
    %27 = tpu.concatenate %25, %26 in 1 : vector<2x1x256xf32>, vector<2x1x256xf32> -> vector<2x2x256xf32>
    %c0_5 = arith.constant 0 : index
    %c0_6 = arith.constant 0 : index
    %c0_7 = arith.constant 0 : index
    %28 = vector.load %arg4[%c0_5, %c0_6, %c0_7] : memref<2x2x256xf32, #tpu.memory_space<vmem>>, vector<2x2x256xf32>
    tpu.vector_store %arg4[%c0_5, %c0_6, %c0_7], %27 {strides = array<i32>} : memref<2x2x256xf32, #tpu.memory_space<vmem>>, vector<2x2x256xf32>,
    return
  }
  func.func @transform_0(%arg0: i32) -> (i32, i32, i32) {
    %c0_i32 = arith.constant 0 : i32
    %c0_i32_0 = arith.constant 0 : i32
    %c0_i32_1 = arith.constant 0 : i32
    return %c0_i32, %c0_i32_0, %arg0 : i32, i32, i32
  }
  func.func @transform_1(%arg0: i32) -> i32 {
    %c0_i32 = arith.constant 0 : i32
    %c0_i32_0 = arith.constant 0 : i32
    return %c0_i32 : i32
  }
  func.func @transform_2(%arg0: i32) -> i32 {
    %c0_i32 = arith.constant 0 : i32
    %c0_i32_0 = arith.constant 0 : i32
    return %c0_i32 : i32
  }
  func.func @transform_3(%arg0: i32) -> (i32, i32, i32) {
    %c0_i32 = arith.constant 0 : i32
    %c0_i32_0 = arith.constant 0 : i32
    %c0_i32_1 = arith.constant 0 : i32
    return %c0_i32, %c0_i32_0, %arg0 : i32, i32, i32
  }
}

</mosaic_0001>

<llo_original>
// kernel: tpu_custom_call.1
$region0: #{tpu_custom_call.1}
  #allocation0 [shape = 'u32[]', space=smem, size = 0x4, offset = 0x4, fixed_abs, tag = 'smem constant byte address 0x4 - core index']
  #allocation1 [shape = 'u32[144,128]{1,0:T(1,128)}', space=vmem, size = 0x12000, scoped, tag = 'internal scratch']
  %s0 = inlined_call_operand.hbm [shape: f32[2,2,256], index: 0, kind: input, shape index: {}]
  %s1 = inlined_call_operand.vmem [shape: f32[4], index: 1, kind: input, shape index: {}]
  %s2 = inlined_call_operand.vmem [shape: f32[2], index: 2, kind: input, shape index: {}]
  %s3 = inlined_call_operand.hbm [shape: f32[2,2,256], index: 3, kind: output, shape index: {}]
  %s4 = sld [smem:[#allocation0]]
  $region34: #{tpu_custom_call.1} parent=0
    _
  %s6 = ssub.s32 1, %s4
  %s7 = scalar_select 0, %s6, %s4
  $region1: #{tpu_custom_call.1} parent=0
    #allocation2 [shape = 'u8[4096]{0}', space=vmem, size = 0x1000, scoped, tag = 'input window, operand 0, single buffered']
    #allocation3 [shape = 's32[1]{0}', space=sflag, size = 0x4, scoped, tag = 'scoped memory for tpu_custom_call.1']
    #allocation4 [shape = 's32[1]{0}', space=sflag, size = 0x4, scoped, tag = 'scoped memory for tpu_custom_call.1']
    #allocation5 [shape = 's32[1]{0}', space=sflag, size = 0x4, scoped, tag = 'scoped memory for tpu_custom_call.1']
    #allocation6 [shape = 'u8[512]{0}', space=smem, size = 0x200, scoped, tag = 'input window, operand 1, single buffered']
    #allocation7 [shape = 'u8[512]{0}', space=smem, size = 0x200, scoped, tag = 'input window, operand 2, single buffered']
    #allocation8 [shape = 's32[1]{0}', space=sflag, size = 0x4, scoped, tag = 'scoped memory for tpu_custom_call.1']
    #allocation9 [shape = 'u8[4096]{0}', space=vmem, size = 0x1000, scoped, tag = 'output window, operand 0, single buffered']
    %8 = vsyncpa [#allocation3], 0
    %9 = vsyncpa [#allocation5], 0
    %10 = vsyncpa [#allocation8], 0
    %11 = vsyncpa [#allocation4], 0
    // Predicated region
    $region2: #{tpu_custom_call.1} parent=1 // pred_check
      _
    $region3: #{tpu_custom_call.1} parent=1 // pred_check_branch
      %13 = sbr.rel (0) target = $region5
    $region4: #{tpu_custom_call.1} parent=1 // pred_region
      %s15 = ssub.s32 128, 128
      %16 = vsyncadd [#allocation3], %s15
      %s17 = sshll.u32 [#allocation2], 4
      %s18 = int_to_ptr.vmem [resolvable:$true] %s17
      %23 = dma.hbm_to_vmem [thread:$0]  %s0, 128, %s18, [#allocation3], 64, 64, 4
    $region5: #{tpu_custom_call.1} parent=1 // pred_fallthru
      _
    // Predicated region
    $region6: #{tpu_custom_call.1} parent=1 // pred_check
      _
    $region7: #{tpu_custom_call.1} parent=1 // pred_check_branch
      %25 = sbr.rel (0) target = $region9
    $region8: #{tpu_custom_call.1} parent=1 // pred_region
      %s27 = ssub.s32 16, 16
      %28 = vsyncadd [#allocation5], %s27
      %s30 = sshll.u32 %s1, 4
      %s31 = int_to_ptr.vmem [resolvable:$true] %s30
      %33 = dma.vmem_to_smem %s31, 16, [#allocation6], [#allocation5]
    $region9: #{tpu_custom_call.1} parent=1 // pred_fallthru
      _
    // Predicated region
    $region10: #{tpu_custom_call.1} parent=1 // pred_check
      _
    $region11: #{tpu_custom_call.1} parent=1 // pred_check_branch
      %35 = sbr.rel (0) target = $region13
    $region12: #{tpu_custom_call.1} parent=1 // pred_region
      %s37 = ssub.s32 16, 16
      %38 = vsyncadd [#allocation8], %s37
      %s40 = sshll.u32 %s2, 4
      %s41 = int_to_ptr.vmem [resolvable:$true] %s40
      %43 = dma.vmem_to_smem %s41, 16, [#allocation7], [#allocation8]
    $region13: #{tpu_custom_call.1} parent=1 // pred_fallthru
      _
    // Predicated region
    $region14: #{tpu_custom_call.1} parent=1 // pred_check
      _
    $region15: #{tpu_custom_call.1} parent=1 // pred_check_branch
      %45 = sbr.rel (0) target = $region17
    $region16: #{tpu_custom_call.1} parent=1 // pred_region
      %46 = dma.done [#allocation3], 128
    $region17: #{tpu_custom_call.1} parent=1 // pred_fallthru
      _
    // Predicated region
    $region18: #{tpu_custom_call.1} parent=1 // pred_check
      _
    $region19: #{tpu_custom_call.1} parent=1 // pred_check_branch
      %48 = sbr.rel (0) target = $region21
    $region20: #{tpu_custom_call.1} parent=1 // pred_region
      %49 = dma.done [#allocation5], 16
    $region21: #{tpu_custom_call.1} parent=1 // pred_fallthru
      _
    // Predicated region
    $region22: #{tpu_custom_call.1} parent=1 // pred_check
      _
    $region23: #{tpu_custom_call.1} parent=1 // pred_check_branch
      %51 = sbr.rel (0) target = $region25
    $region24: #{tpu_custom_call.1} parent=1 // pred_region
      %52 = dma.done [#allocation8], 16
    $region25: #{tpu_custom_call.1} parent=1 // pred_fallthru
      _
    %53 = sfence
    %v54 = vld [vmem:[#allocation2] sm:$0xf]
    %v55 = vld [vmem:[#allocation2 + $0x4] sm:$0xf]
    %s56 = sld [smem:[#allocation6]]
    %v57 = vstv %s56
    %v58 = vmul.f32 %v54, %v57
    %v59 = vmul.f32 %v55, %v57
    %s60 = sld [smem:[#allocation7]]
    %v61 = vstv %s60
    %v62 = vadd.f32 %v58, %v61
    %v63 = vadd.f32 %v59, %v61
    %s64 = sld [smem:[#allocation6 + $0x2]]
    %v65 = vstv %s64
    %v66 = vmul.f32 %v54, %v65
    %v67 = vmul.f32 %v55, %v65
    %v70 = vrot.slane %v66, 7
    %v71 = vrot.slane %v70, 2
    %v72 = vrot.slane %v67, 7
    %v73 = vrot.slane %v72, 2
    %v76 = vadd.f32 %v62, %v71
    %v77 = vadd.f32 %v63, %v73
    %s78 = sld [smem:[#allocation6 + $0x1]]
    %v79 = vstv %s78
    %v80 = vmul.f32 %v54, %v79
    %v81 = vmul.f32 %v55, %v79
    %s82 = sld [smem:[#allocation7 + $0x1]]
    %v83 = vstv %s82
    %v84 = vadd.f32 %v80, %v83
    %v85 = vadd.f32 %v81, %v83
    %s86 = sld [smem:[#allocation6 + $0x3]]
    %v87 = vstv %s86
    %v88 = vmul.f32 %v54, %v87
    %v89 = vmul.f32 %v55, %v87
    %v92 = vrot.slane %v88, 7
    %v93 = vrot.slane %v92, 2
    %v94 = vrot.slane %v89, 7
    %v95 = vrot.slane %v94, 2
    %v98 = vadd.f32 %v84, %v93
    %v99 = vadd.f32 %v85, %v95
    %v102 = vlaneseq
    %v103 = vshrl.u32 %v102, 7
    %v104 = vsub.s32 0, %v103
    %v105 = vrot.slane %v76, %v104
    %v106 = vlaneseq
    %v107 = vshrl.u32 %v106, 7
    %v108 = vsub.s32 2, %v107
    %v109 = vrot.slane %v76, %v108
    %v110 = vlaneseq
    %v111 = vshrl.u32 %v110, 7
    %v112 = vsub.s32 0, %v111
    %v113 = vrot.slane %v77, %v112
    %v114 = vlaneseq
    %v115 = vshrl.u32 %v114, 7
    %v116 = vsub.s32 2, %v115
    %v117 = vrot.slane %v77, %v116
    %v124 = vlaneseq
    %v125 = vshrl.u32 %v124, 7
    %v126 = vsub.s32 0, %v125
    %v127 = vrot.slane %v98, %v126
    %v128 = vlaneseq
    %v129 = vshrl.u32 %v128, 7
    %v130 = vsub.s32 2, %v129
    %v131 = vrot.slane %v98, %v130
    %v132 = vlaneseq
    %v133 = vshrl.u32 %v132, 7
    %v134 = vsub.s32 0, %v133
    %v135 = vrot.slane %v99, %v134
    %v136 = vlaneseq
    %v137 = vshrl.u32 %v136, 7
    %v138 = vsub.s32 2, %v137
    %v139 = vrot.slane %v99, %v138
    %vm144 = vcmask 1040384
    %v145 = vsel %vm144, %v105, %v127
    %v146 = vsel %vm144, %v109, %v131
    %v147 = vsel %vm144, %v113, %v135
    %v148 = vsel %vm144, %v117, %v139
    %v153 = vcombine.low %v145, %v146
    %v155 = vunpack.c.l.s4 1983009808
    %v156 = vunpack.c.0.s8 %v155
    %v157 = vlaneseq
    %v158 = vshrl.u32 %v157, 7
    %v159 = vsub.s32 %v156, %v158
    %v160 = vrot.slane %v153, %v159
    %v161 = vcombine.low %v147, %v148
    %v163 = vunpack.c.l.s4 1983009808
    %v164 = vunpack.c.0.s8 %v163
    %v165 = vlaneseq
    %v166 = vshrl.u32 %v165, 7
    %v167 = vsub.s32 %v164, %v166
    %v168 = vrot.slane %v161, %v167
    %171 = vst [vmem:[#allocation9] sm:$0xf] %v160
    %172 = vst [vmem:[#allocation9 + $0x4] sm:$0xf] %v168
    // Predicated region
    $region26: #{tpu_custom_call.1} parent=1 // pred_check
      _
    $region27: #{tpu_custom_call.1} parent=1 // pred_check_branch
      %174 = sbr.rel (0) target = $region29
    $region28: #{tpu_custom_call.1} parent=1 // pred_region
      %s176 = ssub.s32 128, 128
      %177 = vsyncadd [#allocation4], %s176
      %s178 = sshll.u32 [#allocation9], 4
      %s179 = int_to_ptr.vmem [resolvable:$true] %s178
      %184 = dma.vmem_to_hbm [thread:$0]  %s179, 128, %s3, [#allocation4], 64, 64, 4
    $region29: #{tpu_custom_call.1} parent=1 // pred_fallthru
      _
    // Predicated region
    $region30: #{tpu_custom_call.1} parent=1 // pred_check
      _
    $region31: #{tpu_custom_call.1} parent=1 // pred_check_branch
      %186 = sbr.rel (0) target = $region33
    $region32: #{tpu_custom_call.1} parent=1 // pred_region
      %187 = dma.done [#allocation4], 128
    $region33: #{tpu_custom_call.1} parent=1 // pred_fallthru
      _
    %188 = vsyncpa [#allocation3], 1
    %189 = vsyncpa [#allocation4], 1
    %190 = vsyncpa [#allocation5], 1
    %191 = vsyncpa [#allocation8], 1

</llo_original>
